<compile_context>
chip_gen: v7x
topology: tpu7x:2x2x1
jax: 0.10.0
libtpu: 0.0.40
codegen_flags: <defaults>
</compile_context>

<pallas_src>
import functools
import math

import jax
import jax.numpy as jnp
from jax import lax
from jax.experimental import pallas as pl
from jax.experimental.pallas import tpu as pltpu


def _mix32(x):
    """splitmix32-style finalizer on uint32 values (plain jnp ops only)."""
    x = x ^ (x >> 16)
    x = x * jnp.uint32(0x7FEB352D)
    x = x ^ (x >> 15)
    x = x * jnp.uint32(0x846CA68B)
    x = x ^ (x >> 16)
    return x


def _encoder_random_kernel(seed_ref, obs_ref, mean_ref, nhiv_ref, out_ref, *, total_batch):
    """seed_ref: SMEM (1,) int32
    obs_ref:  VMEM (Bt, N) f32           observation, pre-broadcast over pop_dim
    mean_ref: VMEM (1, N)  f32           flattened population means
    nhiv_ref: VMEM (1, N)  f32           -0.5 / std^2 (folded in the wrapper)
    out_ref:  VMEM (spike_ts, Bt, N) f32 spike-train tile (time-major)"""
    T, Bt, N = out_ref.shape

    # Gaussian receptive-field activation, lane-dense: (Bt, N) in (0, 1].
    diff = obs_ref[...] - mean_ref[...]
    pop_act = jnp.exp(diff * diff * nhiv_ref[...])

    # Integer 24-bit Bernoulli threshold; p == 1 maps to 2^24 (> any draw) -> always fires.
    thresh = (pop_act * jnp.float32(1 << 24)).astype(jnp.int32)          # (Bt, N)

    # Stateless counter-based PRNG: one bulk draw for the whole (T, Bt, N) tile.
    b0 = pl.program_id(0) * Bt                                           # global batch offset
    t_i = lax.broadcasted_iota(jnp.int32, (T, Bt, N), 0)
    b_i = lax.broadcasted_iota(jnp.int32, (T, Bt, N), 1) + b0
    n_i = lax.broadcasted_iota(jnp.int32, (T, Bt, N), 2)
    ctr = (t_i * total_batch + b_i) * N + n_i                            # unique per element

    seed = seed_ref[0].astype(jnp.uint32)
    x = ctr.astype(jnp.uint32) + seed * jnp.uint32(0x9E3779B9)
    bits = _mix32(_mix32(x))                                             # ~uniform uint32

    u24 = (bits >> 8).astype(jnp.int32)                                  # uniform in [0, 2^24)
    out_ref[...] = (u24 < thresh[None, :, :]).astype(out_ref.dtype)


def _pick_batch_tile(batch, n, spike_ts, tile_bytes=2 << 20):
    """Largest batch tile (multiple of 8, dividing batch) with output tile <= tile_bytes.
    Keeps 2x double-buffered tiles well under the default scoped-VMEM limit on
    v5e / v6e / v7x without needing an explicit vmem_limit_bytes."""
    if batch % 8 != 0:
        return batch                      # tiny / ragged batch: single tile
    bt = max(8, min(batch, ((tile_bytes // (spike_ts * n * 4)) // 8) * 8))
    while batch % bt != 0:
        bt -= 8
    return bt


def pop_spike_encoder_random(obs, mean, std, spike_ts, seed=0, time_major=False):
    """obs: (B, obs_dim) f32; mean/std: (1, obs_dim, pop_dim) f32.
    Returns (B, obs_dim*pop_dim, spike_ts) f32 (PyTorch layout), or the time-major
    (spike_ts, B, obs_dim*pop_dim) kernel layout if time_major=True (skips an extra
    full HBM round trip -- prefer it if the downstream SNN iterates over time)."""
    B, obs_dim = obs.shape
    pop_dim = mean.shape[-1]
    N = obs_dim * pop_dim

    # Lane-dense flattened params; fold the divide: exp(-0.5 d^2/s^2) = exp(d^2 * (-0.5/s^2)).
    mean_f = mean.reshape(1, N).astype(jnp.float32)
    nhiv = (-0.5 / (std.astype(jnp.float32) ** 2)).reshape(1, N)
    obs_b = jnp.repeat(obs.astype(jnp.float32), pop_dim, axis=1)         # (B, N) lane-dense
    seed_arr = jnp.asarray([seed], dtype=jnp.int32)

    bt = _pick_batch_tile(B, N, spike_ts)
    grid = (B // bt,)

    kernel = functools.partial(_encoder_random_kernel, total_batch=B)
    out = pl.pallas_call(
        kernel,
        out_shape=jax.ShapeDtypeStruct((spike_ts, B, N), jnp.float32),
        grid=grid,
        in_specs=[
            pl.BlockSpec(memory_space=pltpu.MemorySpace.SMEM),           # seed scalar
            pl.BlockSpec((bt, N), lambda i: (i, 0)),                     # obs (broadcast)
            pl.BlockSpec((1, N), lambda i: (0, 0)),                      # mean
            pl.BlockSpec((1, N), lambda i: (0, 0)),                      # -0.5/std^2
        ],
        out_specs=pl.BlockSpec((spike_ts, bt, N), lambda i: (0, i, 0)),
        compiler_params=pltpu.CompilerParams(
            dimension_semantics=("parallel",),                           # batch tiles independent
        ),
    )(seed_arr, obs_b, mean_f, nhiv)

    if time_major:
        return out
    # PyTorch layout (B, N, spike_ts).  NOTE: this transpose is an extra HBM round
    # trip of the whole output; pass time_major=True to consume the kernel layout.
    return jnp.transpose(out, (1, 2, 0))


def make_encoder_params(obs_dim, pop_dim, mean_range, std):
    """Deterministic parameter init, mirroring PopSpikeEncoderDeterministic.__init__."""
    delta_mean = (mean_range[1] - mean_range[0]) / (pop_dim - 1)
    mean_row = mean_range[0] + delta_mean * jnp.arange(pop_dim, dtype=jnp.float32)
    mean = jnp.broadcast_to(mean_row, (1, obs_dim, pop_dim)).astype(jnp.float32)
    std_arr = jnp.full((1, obs_dim, pop_dim), std, dtype=jnp.float32)
    return mean, std_arr


if __name__ == "__main__":
    batch = 2
    obs_dim = 4
    pop_dim = 16
    spike_ts = 8
    mean_range = (-3.0, 3.0)
    std = math.sqrt(0.15)

    key = jax.random.PRNGKey(0)
    obs = jax.random.normal(key, (batch, obs_dim), dtype=jnp.float32)
    mean, std_arr = make_encoder_params(obs_dim, pop_dim, mean_range, std)

    pop_spikes = pop_spike_encoder_random(obs, mean, std_arr, spike_ts, seed=0)
    pop_spikes = jax.block_until_ready(pop_spikes)

    # Layout / dtype checks (matches PyTorch forward output).
    assert pop_spikes.shape == (batch, obs_dim * pop_dim, spike_ts)
    assert pop_spikes.dtype == jnp.float32
    # Spikes are binary {0, 1}.
    assert bool(jnp.all((pop_spikes == 0.0) | (pop_spikes == 1.0)))
    # Statistical sanity: mean spike rate ~= mean Bernoulli probability (8192 draws).
    pop_act_ref = jnp.exp(
        -0.5 * (obs[:, :, None] - mean) ** 2 / (std_arr ** 2)
    ).reshape(batch, obs_dim * pop_dim)
    assert abs(float(pop_spikes.mean()) - float(pop_act_ref.mean())) < 0.05

    print("KERNEL_OK")
</pallas_src>

<mosaic_0001>
module attributes {stable_mosaic.version = 11 : i64} {
  func.func @_encoder_random_kernel(%arg0: i32, %arg1: memref<1xi32, #tpu.memory_space<smem>>, %arg2: memref<2x64xf32, #tpu.memory_space<vmem>>, %arg3: memref<1x64xf32, #tpu.memory_space<vmem>>, %arg4: memref<1x64xf32, #tpu.memory_space<vmem>>, %arg5: memref<8x2x64xf32, #tpu.memory_space<vmem>>) attributes {dimension_semantics = [#tpu.dimension_semantics<parallel>], iteration_bounds = array<i64: 1>, scalar_prefetch = 0 : i64, scratch_operands = 0 : i64, tpu.core_type = #tpu.core_type<tc>, window_params = [{transform_indices = @transform_0, window_bounds = array<i64: 1>}, {transform_indices = @transform_1, window_bounds = array<i64: 2, 64>}, {pipeline_mode = #tpu.pipeline_mode<synchronous>, transform_indices = @transform_2, window_bounds = array<i64: 1, 64>}, {pipeline_mode = #tpu.pipeline_mode<synchronous>, transform_indices = @transform_3, window_bounds = array<i64: 1, 64>}, {transform_indices = @transform_4, window_bounds = array<i64: 8, 2, 64>}]} {
    %c0 = arith.constant 0 : index
    %c0_0 = arith.constant 0 : index
    %0 = vector.load %arg2[%c0, %c0_0] : memref<2x64xf32, #tpu.memory_space<vmem>>, vector<2x64xf32>
    %c0_1 = arith.constant 0 : index
    %c0_2 = arith.constant 0 : index
    %1 = vector.load %arg3[%c0_1, %c0_2] : memref<1x64xf32, #tpu.memory_space<vmem>>, vector<1x64xf32>
    %2 = vector.broadcast %1 : vector<1x64xf32> to vector<2x64xf32>
    %3 = arith.subf %0, %2 : vector<2x64xf32>
    %4 = arith.mulf %3, %3 : vector<2x64xf32>
    %c0_3 = arith.constant 0 : index
    %c0_4 = arith.constant 0 : index
    %5 = vector.load %arg4[%c0_3, %c0_4] : memref<1x64xf32, #tpu.memory_space<vmem>>, vector<1x64xf32>
    %6 = vector.broadcast %5 : vector<1x64xf32> to vector<2x64xf32>
    %7 = arith.mulf %4, %6 : vector<2x64xf32>
    %8 = math.exp %7 : vector<2x64xf32>
    %cst = arith.constant 0x4B800000 : f32
    %9 = vector.broadcast %cst : f32 to vector<2x64xf32>
    %10 = arith.mulf %8, %9 : vector<2x64xf32>
    %11 = arith.fptosi %10 : vector<2x64xf32> to vector<2x64xi32>
    %c2_i32 = arith.constant 2 : i32
    %12 = arith.muli %arg0, %c2_i32 : i32
    %13 = tpu.iota {dimensions = array<i32: 0>} : vector<8x2x64xi32>
    %14 = tpu.iota {dimensions = array<i32: 1>} : vector<8x2x64xi32>
    %15 = vector.broadcast %12 : i32 to vector<8x2x64xi32>
    %16 = arith.addi %14, %15 : vector<8x2x64xi32>
    %17 = tpu.iota {dimensions = array<i32: 2>} : vector<8x2x64xi32>
    %c2_i32_5 = arith.constant 2 : i32
    %18 = vector.broadcast %c2_i32_5 : i32 to vector<8x2x64xi32>
    %19 = arith.muli %13, %18 : vector<8x2x64xi32>
    %20 = arith.addi %19, %16 : vector<8x2x64xi32>
    %c64_i32 = arith.constant 64 : i32
    %21 = vector.broadcast %c64_i32 : i32 to vector<8x2x64xi32>
    %22 = arith.muli %20, %21 : vector<8x2x64xi32>
    %23 = arith.addi %22, %17 : vector<8x2x64xi32>
    %c0_6 = arith.constant 0 : index
    %24 = memref.load %arg1[%c0_6] : memref<1xi32, #tpu.memory_space<smem>>
    %c-1640531527_i32 = arith.constant -1640531527 : i32
    %25 = arith.muli %24, %c-1640531527_i32 : i32
    %26 = vector.broadcast %25 : i32 to vector<8x2x64xi32>
    %27 = arith.addi %23, %26 : vector<8x2x64xi32>
    %c16_i32 = arith.constant 16 : i32
    %28 = vector.broadcast %c16_i32 : i32 to vector<8x2x64xi32>
    %29 = arith.shrui %27, %28 : vector<8x2x64xi32>
    %30 = arith.xori %27, %29 : vector<8x2x64xi32>
    %c2146121005_i32 = arith.constant 2146121005 : i32
    %31 = vector.broadcast %c2146121005_i32 : i32 to vector<8x2x64xi32>
    %32 = arith.muli %30, %31 : vector<8x2x64xi32>
    %c15_i32 = arith.constant 15 : i32
    %33 = vector.broadcast %c15_i32 : i32 to vector<8x2x64xi32>
    %34 = arith.shrui %32, %33 : vector<8x2x64xi32>
    %35 = arith.xori %32, %34 : vector<8x2x64xi32>
    %c-2073254261_i32 = arith.constant -2073254261 : i32
    %36 = vector.broadcast %c-2073254261_i32 : i32 to vector<8x2x64xi32>
    %37 = arith.muli %35, %36 : vector<8x2x64xi32>
    %c16_i32_7 = arith.constant 16 : i32
    %38 = vector.broadcast %c16_i32_7 : i32 to vector<8x2x64xi32>
    %39 = arith.shrui %37, %38 : vector<8x2x64xi32>
    %40 = arith.xori %37, %39 : vector<8x2x64xi32>
    %c16_i32_8 = arith.constant 16 : i32
    %41 = vector.broadcast %c16_i32_8 : i32 to vector<8x2x64xi32>
    %42 = arith.shrui %40, %41 : vector<8x2x64xi32>
    %43 = arith.xori %40, %42 : vector<8x2x64xi32>
    %c2146121005_i32_9 = arith.constant 2146121005 : i32
    %44 = vector.broadcast %c2146121005_i32_9 : i32 to vector<8x2x64xi32>
    %45 = arith.muli %43, %44 : vector<8x2x64xi32>
    %c15_i32_10 = arith.constant 15 : i32
    %46 = vector.broadcast %c15_i32_10 : i32 to vector<8x2x64xi32>
    %47 = arith.shrui %45, %46 : vector<8x2x64xi32>
    %48 = arith.xori %45, %47 : vector<8x2x64xi32>
    %c-2073254261_i32_11 = arith.constant -2073254261 : i32
    %49 = vector.broadcast %c-2073254261_i32_11 : i32 to vector<8x2x64xi32>
    %50 = arith.muli %48, %49 : vector<8x2x64xi32>
    %c16_i32_12 = arith.constant 16 : i32
    %51 = vector.broadcast %c16_i32_12 : i32 to vector<8x2x64xi32>
    %52 = arith.shrui %50, %51 : vector<8x2x64xi32>
    %53 = arith.xori %50, %52 : vector<8x2x64xi32>
    %c8_i32 = arith.constant 8 : i32
    %54 = vector.broadcast %c8_i32 : i32 to vector<8x2x64xi32>
    %55 = arith.shrui %53, %54 : vector<8x2x64xi32>
    %56 = vector.shape_cast %11 : vector<2x64xi32> to vector<1x2x64xi32>
    %57 = vector.broadcast %56 : vector<1x2x64xi32> to vector<8x2x64xi32>
    %58 = arith.cmpi slt, %55, %57 : vector<8x2x64xi32>
    %59 = arith.extui %58 : vector<8x2x64xi1> to vector<8x2x64xi32>
    %60 = arith.sitofp %59 : vector<8x2x64xi32> to vector<8x2x64xf32>
    %c0_13 = arith.constant 0 : index
    %c0_14 = arith.constant 0 : index
    %c0_15 = arith.constant 0 : index
    %61 = vector.load %arg5[%c0_13, %c0_14, %c0_15] : memref<8x2x64xf32, #tpu.memory_space<vmem>>, vector<8x2x64xf32>
    tpu.vector_store %arg5[%c0_13, %c0_14, %c0_15], %60 {strides = array<i32>} : memref<8x2x64xf32, #tpu.memory_space<vmem>>, vector<8x2x64xf32>,
    return
  }
  func.func @transform_0(%arg0: i32) -> i32 {
    %c0_i32 = arith.constant 0 : i32
    %c0_i32_0 = arith.constant 0 : i32
    return %c0_i32 : i32
  }
  func.func @transform_1(%arg0: i32) -> (i32, i32) {
    %c0_i32 = arith.constant 0 : i32
    %c0_i32_0 = arith.constant 0 : i32
    return %arg0, %c0_i32 : i32, i32
  }
  func.func @transform_2(%arg0: i32) -> (i32, i32) {
    %c0_i32 = arith.constant 0 : i32
    %c0_i32_0 = arith.constant 0 : i32
    %c0_i32_1 = arith.constant 0 : i32
    return %c0_i32, %c0_i32_0 : i32, i32
  }
  func.func @transform_3(%arg0: i32) -> (i32, i32) {
    %c0_i32 = arith.constant 0 : i32
    %c0_i32_0 = arith.constant 0 : i32
    %c0_i32_1 = arith.constant 0 : i32
    return %c0_i32, %c0_i32_0 : i32, i32
  }
  func.func @transform_4(%arg0: i32) -> (i32, i32, i32) {
    %c0_i32 = arith.constant 0 : i32
    %c0_i32_0 = arith.constant 0 : i32
    %c0_i32_1 = arith.constant 0 : i32
    return %c0_i32, %arg0, %c0_i32_0 : i32, i32, i32
  }
}

</mosaic_0001>

<llo_original>
// kernel: tpu_custom_call.1
$region0: #{tpu_custom_call.1}
  #allocation0 [shape = 'u32[]', space=smem, size = 0x4, offset = 0x4, fixed_abs, tag = 'smem constant byte address 0x4 - core index']
  #allocation1 [shape = 'u32[144,128]{1,0:T(1,128)}', space=vmem, size = 0x12000, scoped, tag = 'internal scratch']
  #allocation2 [shape = 's32[1]{0:T(128)S(6)}', space=smem, size = 0x200, scoped, tag = 'scoped memory for tpu_custom_call.1']
  %s0 = inlined_call_operand.<no memory space> [shape: s32[1], index: 0, kind: input, shape index: {}]
  %s1 = inlined_call_operand.vmem [shape: f32[2,64], index: 1, kind: input, shape index: {}]
  %s2 = inlined_call_operand.vmem [shape: f32[1,64], index: 2, kind: input, shape index: {}]
  %s3 = inlined_call_operand.vmem [shape: f32[1,64], index: 3, kind: input, shape index: {}]
  %s4 = inlined_call_operand.hbm [shape: f32[8,2,64], index: 4, kind: output, shape index: {}]
  %s5 = sld [smem:[#allocation0]]
  $region26: #{tpu_custom_call.1} parent=0
    _
  %s7 = ssub.s32 1, %s5
  %s8 = scalar_select 0, %s7, %s5
  %9 = sst [smem:[#allocation2]] %s0
  $region1: #{tpu_custom_call.1} parent=0
    #allocation3 [shape = 'u8[8192]{0}', space=vmem, size = 0x2000, scoped, tag = 'output window, operand 0, single buffered']
    #allocation4 [shape = 's32[1]{0}', space=sflag, size = 0x4, scoped, tag = 'scoped memory for tpu_custom_call.1']
    %10 = vsyncpa [#allocation4], 0
    // Predicated region
    $region2: #{tpu_custom_call.1} parent=1 // pred_check
      _
    $region3: #{tpu_custom_call.1} parent=1 // pred_check_branch
      %12 = sbr.rel (0) target = $region5
    $region4: #{tpu_custom_call.1} parent=1 // pred_region
      _
    $region5: #{tpu_custom_call.1} parent=1 // pred_fallthru
      _
    // Predicated region
    $region6: #{tpu_custom_call.1} parent=1 // pred_check
      _
    $region7: #{tpu_custom_call.1} parent=1 // pred_check_branch
      %14 = sbr.rel (0) target = $region9
    $region8: #{tpu_custom_call.1} parent=1 // pred_region
      _
    $region9: #{tpu_custom_call.1} parent=1 // pred_fallthru
      _
    // Predicated region
    $region10: #{tpu_custom_call.1} parent=1 // pred_check
      _
    $region11: #{tpu_custom_call.1} parent=1 // pred_check_branch
      %16 = sbr.rel (0) target = $region13
    $region12: #{tpu_custom_call.1} parent=1 // pred_region
      _
    $region13: #{tpu_custom_call.1} parent=1 // pred_fallthru
      _
    // Predicated region
    $region14: #{tpu_custom_call.1} parent=1 // pred_check
      _
    $region15: #{tpu_custom_call.1} parent=1 // pred_check_branch
      %18 = sbr.rel (0) target = $region17
    $region16: #{tpu_custom_call.1} parent=1 // pred_region
      _
    $region17: #{tpu_custom_call.1} parent=1 // pred_fallthru
      _
    %v19 = vld [vmem:[%s1] sm:$0x3]
    %v20 = vld [vmem:[%s2] sm:$0x1]
    %v22 = vlaneseq
    %v23 = vshrl.u32 %v22, 7
    %v24 = vsub.s32 0, %v23
    %v25 = vrot.slane %v20, %v24
    %v27 = vsub.f32 %v19, %v25
    %v28 = vmul.f32 %v27, %v27
    %v29 = vld [vmem:[%s3] sm:$0x1]
    %v31 = vlaneseq
    %v32 = vshrl.u32 %v31, 7
    %v33 = vsub.s32 0, %v32
    %v34 = vrot.slane %v29, %v33
    %v36 = vmul.f32 %v28, %v34
    %v37 = vmul.f32 %v36, 1.442695
    %v38 = vpow.pop %v37
    %v39 = vmul.f32 %v38, 16777216.0
    %v40 = vcvt.f32.s32.to.zero.pseudo %v39
    %s41 = smul.u32 0, 2
    %v42 = vlaneseq
    %v43 = vshrl.u32 %v42, 7
    %v44 = vstv %s41
    %v45 = vadd.s32 %v43, %v44
    %v46 = vlaneseq
    %v47 = vand.u32 %v46, 127
    %v48 = vadd.s32 %v45, 2
    %v49 = vadd.s32 %v45, 4
    %v50 = vadd.s32 %v45, 6
    %v51 = vadd.s32 %v45, 8
    %v52 = vadd.s32 %v45, 10
    %v53 = vadd.s32 %v45, 12
    %v54 = vadd.s32 %v45, 14
    %v55 = vmul.u32 %v45, 64
    %v56 = vmul.u32 %v48, 64
    %v57 = vmul.u32 %v49, 64
    %v58 = vmul.u32 %v50, 64
    %v59 = vmul.u32 %v51, 64
    %v60 = vmul.u32 %v52, 64
    %v61 = vmul.u32 %v53, 64
    %v62 = vmul.u32 %v54, 64
    %v63 = vadd.s32 %v55, %v47
    %v64 = vadd.s32 %v56, %v47
    %v65 = vadd.s32 %v57, %v47
    %v66 = vadd.s32 %v58, %v47
    %v67 = vadd.s32 %v59, %v47
    %v68 = vadd.s32 %v60, %v47
    %v69 = vadd.s32 %v61, %v47
    %v70 = vadd.s32 %v62, %v47
    %s71 = sld [smem:[#allocation2]]
    %s72 = smul.u32 %s71, 2654435769
    %v73 = vstv %s72
    %v74 = vadd.s32 %v63, %v73
    %v75 = vadd.s32 %v64, %v73
    %v76 = vadd.s32 %v65, %v73
    %v77 = vadd.s32 %v66, %v73
    %v78 = vadd.s32 %v67, %v73
    %v79 = vadd.s32 %v68, %v73
    %v80 = vadd.s32 %v69, %v73
    %v81 = vadd.s32 %v70, %v73
    %v82 = vshrl.u32 %v74, 16
    %v83 = vshrl.u32 %v75, 16
    %v84 = vshrl.u32 %v76, 16
    %v85 = vshrl.u32 %v77, 16
    %v86 = vshrl.u32 %v78, 16
    %v87 = vshrl.u32 %v79, 16
    %v88 = vshrl.u32 %v80, 16
    %v89 = vshrl.u32 %v81, 16
    %v90 = vxor.u32 %v74, %v82
    %v91 = vxor.u32 %v75, %v83
    %v92 = vxor.u32 %v76, %v84
    %v93 = vxor.u32 %v77, %v85
    %v94 = vxor.u32 %v78, %v86
    %v95 = vxor.u32 %v79, %v87
    %v96 = vxor.u32 %v80, %v88
    %v97 = vxor.u32 %v81, %v89
    %v98 = vmul.u32 %v90, 2146121005
    %v99 = vmul.u32 %v91, 2146121005
    %v100 = vmul.u32 %v92, 2146121005
    %v101 = vmul.u32 %v93, 2146121005
    %v102 = vmul.u32 %v94, 2146121005
    %v103 = vmul.u32 %v95, 2146121005
    %v104 = vmul.u32 %v96, 2146121005
    %v105 = vmul.u32 %v97, 2146121005
    %v106 = vshrl.u32 %v98, 15
    %v107 = vshrl.u32 %v99, 15
    %v108 = vshrl.u32 %v100, 15
    %v109 = vshrl.u32 %v101, 15
    %v110 = vshrl.u32 %v102, 15
    %v111 = vshrl.u32 %v103, 15
    %v112 = vshrl.u32 %v104, 15
    %v113 = vshrl.u32 %v105, 15
    %v114 = vxor.u32 %v98, %v106
    %v115 = vxor.u32 %v99, %v107
    %v116 = vxor.u32 %v100, %v108
    %v117 = vxor.u32 %v101, %v109
    %v118 = vxor.u32 %v102, %v110
    %v119 = vxor.u32 %v103, %v111
    %v120 = vxor.u32 %v104, %v112
    %v121 = vxor.u32 %v105, %v113
    %v122 = vmul.u32 %v114, 2221713035
    %v123 = vmul.u32 %v115, 2221713035
    %v124 = vmul.u32 %v116, 2221713035
    %v125 = vmul.u32 %v117, 2221713035
    %v126 = vmul.u32 %v118, 2221713035
    %v127 = vmul.u32 %v119, 2221713035
    %v128 = vmul.u32 %v120, 2221713035
    %v129 = vmul.u32 %v121, 2221713035
    %v130 = vshrl.u32 %v122, 16
    %v131 = vshrl.u32 %v123, 16
    %v132 = vshrl.u32 %v124, 16
    %v133 = vshrl.u32 %v125, 16
    %v134 = vshrl.u32 %v126, 16
    %v135 = vshrl.u32 %v127, 16
    %v136 = vshrl.u32 %v128, 16
    %v137 = vshrl.u32 %v129, 16
    %v138 = vxor.u32 %v122, %v130
    %v139 = vxor.u32 %v123, %v131
    %v140 = vxor.u32 %v124, %v132
    %v141 = vxor.u32 %v125, %v133
    %v142 = vxor.u32 %v126, %v134
    %v143 = vxor.u32 %v127, %v135
    %v144 = vxor.u32 %v128, %v136
    %v145 = vxor.u32 %v129, %v137
    %v146 = vshrl.u32 %v138, 16
    %v147 = vshrl.u32 %v139, 16
    %v148 = vshrl.u32 %v140, 16
    %v149 = vshrl.u32 %v141, 16
    %v150 = vshrl.u32 %v142, 16
    %v151 = vshrl.u32 %v143, 16
    %v152 = vshrl.u32 %v144, 16
    %v153 = vshrl.u32 %v145, 16
    %v154 = vxor.u32 %v138, %v146
    %v155 = vxor.u32 %v139, %v147
    %v156 = vxor.u32 %v140, %v148
    %v157 = vxor.u32 %v141, %v149
    %v158 = vxor.u32 %v142, %v150
    %v159 = vxor.u32 %v143, %v151
    %v160 = vxor.u32 %v144, %v152
    %v161 = vxor.u32 %v145, %v153
    %v162 = vmul.u32 %v154, 2146121005
    %v163 = vmul.u32 %v155, 2146121005
    %v164 = vmul.u32 %v156, 2146121005
    %v165 = vmul.u32 %v157, 2146121005
    %v166 = vmul.u32 %v158, 2146121005
    %v167 = vmul.u32 %v159, 2146121005
    %v168 = vmul.u32 %v160, 2146121005
    %v169 = vmul.u32 %v161, 2146121005
    %v170 = vshrl.u32 %v162, 15
    %v171 = vshrl.u32 %v163, 15
    %v172 = vshrl.u32 %v164, 15
    %v173 = vshrl.u32 %v165, 15
    %v174 = vshrl.u32 %v166, 15
    %v175 = vshrl.u32 %v167, 15
    %v176 = vshrl.u32 %v168, 15
    %v177 = vshrl.u32 %v169, 15
    %v178 = vxor.u32 %v162, %v170
    %v179 = vxor.u32 %v163, %v171
    %v180 = vxor.u32 %v164, %v172
    %v181 = vxor.u32 %v165, %v173
    %v182 = vxor.u32 %v166, %v174
    %v183 = vxor.u32 %v167, %v175
    %v184 = vxor.u32 %v168, %v176
    %v185 = vxor.u32 %v169, %v177
    %v186 = vmul.u32 %v178, 2221713035
    %v187 = vmul.u32 %v179, 2221713035
    %v188 = vmul.u32 %v180, 2221713035
    %v189 = vmul.u32 %v181, 2221713035
    %v190 = vmul.u32 %v182, 2221713035
    %v191 = vmul.u32 %v183, 2221713035
    %v192 = vmul.u32 %v184, 2221713035
    %v193 = vmul.u32 %v185, 2221713035
    %v194 = vshrl.u32 %v186, 16
    %v195 = vshrl.u32 %v187, 16
    %v196 = vshrl.u32 %v188, 16
    %v197 = vshrl.u32 %v189, 16
    %v198 = vshrl.u32 %v190, 16
    %v199 = vshrl.u32 %v191, 16
    %v200 = vshrl.u32 %v192, 16
    %v201 = vshrl.u32 %v193, 16
    %v202 = vxor.u32 %v186, %v194
    %v203 = vxor.u32 %v187, %v195
    %v204 = vxor.u32 %v188, %v196
    %v205 = vxor.u32 %v189, %v197
    %v206 = vxor.u32 %v190, %v198
    %v207 = vxor.u32 %v191, %v199
    %v208 = vxor.u32 %v192, %v200
    %v209 = vxor.u32 %v193, %v201
    %v210 = vshrl.u32 %v202, 8
    %v211 = vshrl.u32 %v203, 8
    %v212 = vshrl.u32 %v204, 8
    %v213 = vshrl.u32 %v205, 8
    %v214 = vshrl.u32 %v206, 8
    %v215 = vshrl.u32 %v207, 8
    %v216 = vshrl.u32 %v208, 8
    %v217 = vshrl.u32 %v209, 8
    %vm218 = vcmp.lt.s32.totalorder %v210, %v40
    %vm219 = vcmp.lt.s32.totalorder %v211, %v40
    %vm220 = vcmp.lt.s32.totalorder %v212, %v40
    %vm221 = vcmp.lt.s32.totalorder %v213, %v40
    %vm222 = vcmp.lt.s32.totalorder %v214, %v40
    %vm223 = vcmp.lt.s32.totalorder %v215, %v40
    %vm224 = vcmp.lt.s32.totalorder %v216, %v40
    %vm225 = vcmp.lt.s32.totalorder %v217, %v40
    %v226 = vsel %vm218, 1, 0
    %v227 = vsel %vm219, 1, 0
    %v228 = vsel %vm220, 1, 0
    %v229 = vsel %vm221, 1, 0
    %v230 = vsel %vm222, 1, 0
    %v231 = vsel %vm223, 1, 0
    %v232 = vsel %vm224, 1, 0
    %v233 = vsel %vm225, 1, 0
    %v234 = vcvt.s32.f32 %v226
    %v235 = vcvt.s32.f32 %v227
    %v236 = vcvt.s32.f32 %v228
    %v237 = vcvt.s32.f32 %v229
    %v238 = vcvt.s32.f32 %v230
    %v239 = vcvt.s32.f32 %v231
    %v240 = vcvt.s32.f32 %v232
    %v241 = vcvt.s32.f32 %v233
    %vm242 = vcmask 517120
    %243 = vst.msk [vmem:[#allocation3] sm:$0x3] %vm242, %v234
    %244 = vst.msk [vmem:[#allocation3 + $0x2] sm:$0x3] %vm242, %v235
    %245 = vst.msk [vmem:[#allocation3 + $0x4] sm:$0x3] %vm242, %v236
    %246 = vst.msk [vmem:[#allocation3 + $0x6] sm:$0x3] %vm242, %v237
    %247 = vst.msk [vmem:[#allocation3 + $0x8] sm:$0x3] %vm242, %v238
    %248 = vst.msk [vmem:[#allocation3 + $0xa] sm:$0x3] %vm242, %v239
    %249 = vst.msk [vmem:[#allocation3 + $0xc] sm:$0x3] %vm242, %v240
    %250 = vst.msk [vmem:[#allocation3 + $0xe] sm:$0x3] %vm242, %v241
    // Predicated region
    $region18: #{tpu_custom_call.1} parent=1 // pred_check
      _
    $region19: #{tpu_custom_call.1} parent=1 // pred_check_branch
      %252 = sbr.rel (0) target = $region21
    $region20: #{tpu_custom_call.1} parent=1 // pred_region
      %s254 = ssub.s32 256, 256
      %255 = vsyncadd [#allocation4], %s254
      %s256 = sshll.u32 [#allocation3], 4
      %s257 = int_to_ptr.vmem [resolvable:$true] %s256
      %262 = dma.vmem_to_hbm [thread:$0]  %s257, 256, %s4, [#allocation4], 32, 32, 2
    $region21: #{tpu_custom_call.1} parent=1 // pred_fallthru
      _
    // Predicated region
    $region22: #{tpu_custom_call.1} parent=1 // pred_check
      _
    $region23: #{tpu_custom_call.1} parent=1 // pred_check_branch
      %264 = sbr.rel (0) target = $region25
    $region24: #{tpu_custom_call.1} parent=1 // pred_region
      %265 = dma.done [#allocation4], 256
    $region25: #{tpu_custom_call.1} parent=1 // pred_fallthru
      _
    %266 = vsyncpa [#allocation4], 1

</llo_original>
